<compile_context>
chip_gen: v7x
topology: tpu7x:2x2x1
jax: 0.10.0
libtpu: 0.0.40
codegen_flags: <defaults>
</compile_context>

<pallas_src>
import functools

import jax
import jax.numpy as jnp
from jax import lax
from jax.experimental import pallas as pl
from jax.experimental.pallas import tpu as pltpu


def _round_up(v, m):
    return ((v + m - 1) // m) * m


def _sigmoid(x):
    return 1.0 / (1.0 + jnp.exp(-x))


def _vmem_spec():
    return pl.BlockSpec(memory_space=pltpu.MemorySpace.VMEM)


def _fused_lstm_mlp_kernel(x_ref, wih_ref, whh_ref, b_ref, wc_ref, bc_ref,
                           out_ref, seq_scr, pre_scr, *,
                           num_layers, seq_len, batch_pad):
    """Fused multi-layer LSTM + first classifier Linear.

    x_ref   : (T*Np, HP)      time-major zero-padded input (row = t*Np + n)
    wih_ref : (L, HP, 4*HP)   per-layer input->gate weights (gate blocks i,f,g,o)
    whh_ref : (L, HP, 4*HP)   per-layer hidden->gate weights
    b_ref   : (L, 1, 4*HP)    per-layer combined bias (b_ih + b_hh)
    wc_ref  : (T, HP, Cp)     first classifier Linear weight, feature order (t, h)
    bc_ref  : (1, Cp)
    out_ref : (Np, Cp)
    seq_scr : (T*Np, HP)      VMEM: hidden sequence of the current layer
    pre_scr : (T*Np, 4*HP)    VMEM: input-projection pre-activations
    """
    T, Np = seq_len, batch_pad
    HP = x_ref.shape[-1]
    Cp = out_ref.shape[-1]

    for layer in range(num_layers):
        in_ref = x_ref if layer == 0 else seq_scr

        # Input projection for all T timesteps at once: one big MXU matmul.
        pre_scr[...] = (
            jnp.dot(in_ref[...], wih_ref[layer],
                    preferred_element_type=jnp.float32)
            + b_ref[layer]
        )

        def step(t, carry, layer=layer):
            h, c = carry
            row = pl.multiple_of(t * Np, Np)
            gates = pre_scr[pl.ds(row, Np), :] + jnp.dot(
                h, whh_ref[layer], preferred_element_type=jnp.float32)
            i = _sigmoid(gates[:, 0 * HP:1 * HP])
            f = _sigmoid(gates[:, 1 * HP:2 * HP])
            g = jnp.tanh(gates[:, 2 * HP:3 * HP])
            o = _sigmoid(gates[:, 3 * HP:4 * HP])
            c = f * c + i * g
            h = o * jnp.tanh(c)
            seq_scr[pl.ds(row, Np), :] = h
            return (h, c)

        zeros = jnp.zeros((Np, HP), jnp.float32)
        lax.fori_loop(0, T, step, (zeros, zeros))

    # First MLP Linear fused: out[n, c] = sum_t h_t[n, :] @ Wc[t][:, c] + b[c].
    def cls_step(t, acc):
        row = pl.multiple_of(t * Np, Np)
        return acc + jnp.dot(seq_scr[pl.ds(row, Np), :], wc_ref[t],
                             preferred_element_type=jnp.float32)

    acc = lax.fori_loop(0, T, cls_step, jnp.zeros((Np, Cp), jnp.float32))
    out_ref[...] = acc + bc_ref[...]


def _linear_kernel(x_ref, w_ref, b_ref, out_ref):
    """out = x @ W + b on lane-dense padded slabs."""
    out_ref[...] = (
        jnp.dot(x_ref[...], w_ref[...], preferred_element_type=jnp.float32)
        + b_ref[...]
    )


def _linear(x, W, b):
    """y = x @ W.T + b, padded to (8k, 128k) so loads/stores are lane-dense."""
    N, F = x.shape
    C = W.shape[0]
    Np, Fp, Cp = _round_up(N, 8), _round_up(F, 128), _round_up(C, 128)
    xp = jnp.pad(x, ((0, Np - N), (0, Fp - F)))
    wp = jnp.pad(W.T, ((0, Fp - F), (0, Cp - C)))
    bp = jnp.pad(b.reshape(1, C), ((0, 0), (0, Cp - C)))
    out = pl.pallas_call(
        _linear_kernel,
        out_shape=jax.ShapeDtypeStruct((Np, Cp), jnp.float32),
        in_specs=[_vmem_spec()] * 3,
        out_specs=_vmem_spec(),
    )(xp, wp, bp)
    return out[:N, :C]


def blond_lstm_forward(x, lstm_params, mlp_params):
    """x: (N, in_features, seq_len) float32 — what BlondLstmNet.forward receives."""
    N, F, T = x.shape
    L = len(lstm_params)
    H = lstm_params[0][1].shape[1]               # hidden size (weight_hh is (4H, H))
    Np = _round_up(N, 8)
    HP = _round_up(max(F, H), 128)               # shared padded feature/hidden width

    # x.transpose(2, 1) -> (N, T, F); kernel wants time-major (T*Np, HP).
    xt = jnp.transpose(x, (2, 0, 1))                           # (T, N, F)
    xt = jnp.pad(xt, ((0, 0), (0, Np - N), (0, HP - F)))
    xt = xt.reshape(T * Np, HP)

    # Stack + pad LSTM weights: gate order (i, f, g, o), each gate a 128-aligned block.
    wih_l, whh_l, b_l = [], [], []
    for (w_ih, w_hh, b_ih, b_hh) in lstm_params:
        fin = w_ih.shape[1]
        wih = jnp.zeros((HP, 4 * HP), jnp.float32)
        whh = jnp.zeros((HP, 4 * HP), jnp.float32)
        bb = jnp.zeros((1, 4 * HP), jnp.float32)
        for k in range(4):
            wih = wih.at[:fin, k * HP:k * HP + H].set(w_ih[k * H:(k + 1) * H, :].T)
            whh = whh.at[:H, k * HP:k * HP + H].set(w_hh[k * H:(k + 1) * H, :].T)
            bb = bb.at[0, k * HP:k * HP + H].set(
                b_ih[k * H:(k + 1) * H] + b_hh[k * H:(k + 1) * H])
        wih_l.append(wih)
        whh_l.append(whh)
        b_l.append(bb)
    wih_all = jnp.stack(wih_l)                                 # (L, HP, 4*HP)
    whh_all = jnp.stack(whh_l)                                 # (L, HP, 4*HP)
    b_all = jnp.stack(b_l)                                     # (L, 1, 4*HP)

    # First MLP Linear folded into the kernel.  PyTorch's x.reshape(N, -1) flattens
    # the LSTM output in (t, h) order, so feature index = t*H + h.
    W1, b1 = mlp_params[0]
    C1 = W1.shape[0]
    C1p = _round_up(C1, 128)
    wc = jnp.transpose(W1.reshape(C1, T, H), (1, 2, 0))        # (T, H, C1)
    wc = jnp.pad(wc, ((0, 0), (0, HP - H), (0, C1p - C1)))     # (T, HP, C1p)
    bc = jnp.pad(b1.reshape(1, C1), ((0, 0), (0, C1p - C1)))

    kernel = functools.partial(_fused_lstm_mlp_kernel,
                               num_layers=L, seq_len=T, batch_pad=Np)
    out = pl.pallas_call(
        kernel,
        out_shape=jax.ShapeDtypeStruct((Np, C1p), jnp.float32),
        in_specs=[_vmem_spec()] * 6,
        out_specs=_vmem_spec(),
        scratch_shapes=[pltpu.VMEM((T * Np, HP), jnp.float32),
                        pltpu.VMEM((T * Np, 4 * HP), jnp.float32)],
    )(xt, wih_all, whh_all, b_all, wc, bc)
    y = out[:N, :C1]

    # Remaining MLP Linears (only present when LSTM num_layers >= 4).
    for (W, b) in mlp_params[1:]:
        y = _linear(y, W, b)
    return y


def init_params(key, in_features, seq_len, num_classes,
                hidden_layer_size=15, num_layers=1):
    """Deterministic synthetic parameters with the shapes nn.LSTM / nn.Linear use."""
    s = float(hidden_layer_size) ** -0.5
    lstm_params = []
    fin = in_features
    for _ in range(num_layers):
        key, k1, k2, k3, k4 = jax.random.split(key, 5)
        lstm_params.append((
            jax.random.uniform(k1, (4 * hidden_layer_size, fin), jnp.float32, -s, s),
            jax.random.uniform(k2, (4 * hidden_layer_size, hidden_layer_size),
                               jnp.float32, -s, s),
            jax.random.uniform(k3, (4 * hidden_layer_size,), jnp.float32, -s, s),
            jax.random.uniform(k4, (4 * hidden_layer_size,), jnp.float32, -s, s),
        ))
        fin = hidden_layer_size

    mlp_params = []
    in_size = hidden_layer_size * seq_len
    mlp_layers = max(1, int(num_layers / 2))
    for _ in range(1, mlp_layers):
        key, k1, k2 = jax.random.split(key, 3)
        mlp_params.append((
            jax.random.uniform(k1, (in_size // 2, in_size), jnp.float32, -0.05, 0.05),
            jax.random.uniform(k2, (in_size // 2,), jnp.float32, -0.05, 0.05),
        ))
        in_size //= 2
    key, k1, k2 = jax.random.split(key, 3)
    mlp_params.append((
        jax.random.uniform(k1, (num_classes, in_size), jnp.float32, -0.05, 0.05),
        jax.random.uniform(k2, (num_classes,), jnp.float32, -0.05, 0.05),
    ))
    return lstm_params, mlp_params


def _reference_forward(x, lstm_params, mlp_params):
    """Pure-JAX mirror of BlondLstmNet.forward (h0 = c0 = 0, batch_first LSTM)."""
    N = x.shape[0]
    seq = jnp.transpose(x, (0, 2, 1))                          # (N, T, F)
    for (w_ih, w_hh, b_ih, b_hh) in lstm_params:
        H = w_hh.shape[1]
        T = seq.shape[1]
        h = jnp.zeros((N, H), jnp.float32)
        c = jnp.zeros((N, H), jnp.float32)
        outs = []
        for t in range(T):
            gates = seq[:, t, :] @ w_ih.T + b_ih + h @ w_hh.T + b_hh
            i = _sigmoid(gates[:, 0:H])
            f = _sigmoid(gates[:, H:2 * H])
            g = jnp.tanh(gates[:, 2 * H:3 * H])
            o = _sigmoid(gates[:, 3 * H:4 * H])
            c = f * c + i * g
            h = o * jnp.tanh(c)
            outs.append(h)
        seq = jnp.stack(outs, axis=1)                          # (N, T, H)
    y = seq.reshape(N, -1)
    for (W, b) in mlp_params:
        y = y @ W.T + b
    return y


if __name__ == "__main__":
    batch, in_features, seq_len = 2, 4, 16
    hidden_layer_size, num_classes = 15, 5

    key = jax.random.PRNGKey(0)
    key, kx = jax.random.split(key)
    x = jax.random.normal(kx, (batch, in_features, seq_len), jnp.float32)

    # num_layers=1 is the module default; num_layers=4 also exercises the
    # multi-layer LSTM path and the 2-layer MLP classifier path.
    for num_layers in (1, 4):
        lstm_params, mlp_params = init_params(
            key, in_features, seq_len, num_classes, hidden_layer_size, num_layers)
        out = jax.block_until_ready(blond_lstm_forward(x, lstm_params, mlp_params))
        ref = jax.block_until_ready(_reference_forward(x, lstm_params, mlp_params))
        assert out.shape == (batch, num_classes), out.shape
        if not jnp.allclose(out, ref, rtol=1e-3, atol=1e-3):
            raise AssertionError(
                f"num_layers={num_layers}: kernel/reference mismatch, "
                f"max abs err = {float(jnp.max(jnp.abs(out - ref)))}")
    print("KERNEL_OK")
</pallas_src>

<mosaic_0001>
module attributes {stable_mosaic.version = 11 : i64} {
  func.func @_fused_lstm_mlp_kernel(%arg0: memref<128x128xf32, #tpu.memory_space<vmem>>, %arg1: memref<1x128x512xf32, #tpu.memory_space<vmem>>, %arg2: memref<1x128x512xf32, #tpu.memory_space<vmem>>, %arg3: memref<1x1x512xf32, #tpu.memory_space<vmem>>, %arg4: memref<16x128x128xf32, #tpu.memory_space<vmem>>, %arg5: memref<1x128xf32, #tpu.memory_space<vmem>>, %arg6: memref<8x128xf32, #tpu.memory_space<vmem>>, %arg7: memref<128x128xf32, #tpu.memory_space<vmem>>, %arg8: memref<128x512xf32, #tpu.memory_space<vmem>>) attributes {dimension_semantics = [], scalar_prefetch = 0 : i64, scratch_operands = 2 : i64, tpu.core_type = #tpu.core_type<tc>} {
    %c0 = arith.constant 0 : index
    %c0_0 = arith.constant 0 : index
    %0 = vector.load %arg0[%c0, %c0_0] : memref<128x128xf32, #tpu.memory_space<vmem>>, vector<128x128xf32>
    %c0_1 = arith.constant 0 : index
    %c0_2 = arith.constant 0 : index
    %c0_3 = arith.constant 0 : index
    %1 = vector.load %arg1[%c0_1, %c0_2, %c0_3] : memref<1x128x512xf32, #tpu.memory_space<vmem>>, vector<1x128x512xf32>
    %2 = vector.shape_cast %1 : vector<1x128x512xf32> to vector<128x512xf32>
    %cst = arith.constant dense<0.000000e+00> : vector<128x512xf32>
    %3 = tpu.matmul %0, %2, %cst {dimension_numbers = #tpu.dot_dimension_numbers<[1], [0], [0], [1], [0, 0, 1, 1], [], []>} : vector<128x128xf32>, vector<128x512xf32>, vector<128x512xf32> -> vector<128x512xf32>
    %c0_4 = arith.constant 0 : index
    %c0_5 = arith.constant 0 : index
    %c0_6 = arith.constant 0 : index
    %4 = vector.load %arg3[%c0_4, %c0_5, %c0_6] : memref<1x1x512xf32, #tpu.memory_space<vmem>>, vector<1x1x512xf32>
    %5 = vector.shape_cast %4 : vector<1x1x512xf32> to vector<1x512xf32>
    %6 = vector.broadcast %5 : vector<1x512xf32> to vector<128x512xf32>
    %7 = arith.addf %3, %6 : vector<128x512xf32>
    %c0_7 = arith.constant 0 : index
    %c0_8 = arith.constant 0 : index
    %8 = vector.load %arg8[%c0_7, %c0_8] : memref<128x512xf32, #tpu.memory_space<vmem>>, vector<128x512xf32>
    tpu.vector_store %arg8[%c0_7, %c0_8], %7 {strides = array<i32>} : memref<128x512xf32, #tpu.memory_space<vmem>>, vector<128x512xf32>,
    %cst_9 = arith.constant 0.000000e+00 : f32
    %9 = vector.broadcast %cst_9 : f32 to vector<8x128xf32>
    %c0_i32 = arith.constant 0 : i32
    %c16_i32 = arith.constant 16 : i32
    %10 = arith.addi %c0_i32, %c16_i32 : i32
    %c1_i32 = arith.constant 1 : i32
    %11:2 = scf.for %arg9 = %c0_i32 to %10 step %c1_i32 iter_args(%arg10 = %9, %arg11 = %9) -> (vector<8x128xf32>, vector<8x128xf32>)  : i32 {
      %c8_i32 = arith.constant 8 : i32
      %19 = arith.muli %arg9, %c8_i32 : i32
      %20 = tpu.assume_multiple %19, 8 : i32
      %21 = arith.index_cast %20 : i32 to index
      %c0_20 = arith.constant 0 : index
      %22 = vector.load %arg8[%21, %c0_20] : memref<128x512xf32, #tpu.memory_space<vmem>>, vector<8x512xf32>
      %c0_21 = arith.constant 0 : index
      %c0_22 = arith.constant 0 : index
      %c0_23 = arith.constant 0 : index
      %23 = vector.load %arg2[%c0_21, %c0_22, %c0_23] : memref<1x128x512xf32, #tpu.memory_space<vmem>>, vector<1x128x512xf32>
      %24 = vector.shape_cast %23 : vector<1x128x512xf32> to vector<128x512xf32>
      %cst_24 = arith.constant dense<0.000000e+00> : vector<8x512xf32>
      %25 = tpu.matmul %arg10, %24, %cst_24 {dimension_numbers = #tpu.dot_dimension_numbers<[1], [0], [0], [1], [0, 0, 1, 1], [], []>} : vector<8x128xf32>, vector<128x512xf32>, vector<8x512xf32> -> vector<8x512xf32>
      %26 = arith.addf %22, %25 : vector<8x512xf32>
      %27 = vector.extract_strided_slice %26 {offsets = [0, 0], sizes = [8, 128], strides = [1, 1]} : vector<8x512xf32> to vector<8x128xf32>
      %cst_25 = arith.constant 0.000000e+00 : f32
      %28 = vector.broadcast %cst_25 : f32 to vector<8x128xf32>
      %29 = arith.subf %28, %27 : vector<8x128xf32>
      %30 = math.exp %29 : vector<8x128xf32>
      %cst_26 = arith.constant 1.000000e+00 : f32
      %31 = vector.broadcast %cst_26 : f32 to vector<8x128xf32>
      %32 = arith.addf %31, %30 : vector<8x128xf32>
      %cst_27 = arith.constant 1.000000e+00 : f32
      %33 = vector.broadcast %cst_27 : f32 to vector<8x128xf32>
      %34 = arith.divf %33, %32 : vector<8x128xf32>
      %35 = vector.extract_strided_slice %26 {offsets = [0, 128], sizes = [8, 128], strides = [1, 1]} : vector<8x512xf32> to vector<8x128xf32>
      %cst_28 = arith.constant 0.000000e+00 : f32
      %36 = vector.broadcast %cst_28 : f32 to vector<8x128xf32>
      %37 = arith.subf %36, %35 : vector<8x128xf32>
      %38 = math.exp %37 : vector<8x128xf32>
      %cst_29 = arith.constant 1.000000e+00 : f32
      %39 = vector.broadcast %cst_29 : f32 to vector<8x128xf32>
      %40 = arith.addf %39, %38 : vector<8x128xf32>
      %cst_30 = arith.constant 1.000000e+00 : f32
      %41 = vector.broadcast %cst_30 : f32 to vector<8x128xf32>
      %42 = arith.divf %41, %40 : vector<8x128xf32>
      %43 = vector.extract_strided_slice %26 {offsets = [0, 256], sizes = [8, 128], strides = [1, 1]} : vector<8x512xf32> to vector<8x128xf32>
      %44 = math.tanh %43 : vector<8x128xf32>
      %45 = vector.extract_strided_slice %26 {offsets = [0, 384], sizes = [8, 128], strides = [1, 1]} : vector<8x512xf32> to vector<8x128xf32>
      %cst_31 = arith.constant 0.000000e+00 : f32
      %46 = vector.broadcast %cst_31 : f32 to vector<8x128xf32>
      %47 = arith.subf %46, %45 : vector<8x128xf32>
      %48 = math.exp %47 : vector<8x128xf32>
      %cst_32 = arith.constant 1.000000e+00 : f32
      %49 = vector.broadcast %cst_32 : f32 to vector<8x128xf32>
      %50 = arith.addf %49, %48 : vector<8x128xf32>
      %cst_33 = arith.constant 1.000000e+00 : f32
      %51 = vector.broadcast %cst_33 : f32 to vector<8x128xf32>
      %52 = arith.divf %51, %50 : vector<8x128xf32>
      %53 = arith.mulf %42, %arg11 : vector<8x128xf32>
      %54 = arith.mulf %34, %44 : vector<8x128xf32>
      %55 = arith.addf %53, %54 : vector<8x128xf32>
      %56 = math.tanh %55 : vector<8x128xf32>
      %57 = arith.mulf %52, %56 : vector<8x128xf32>
      %58 = arith.index_cast %20 : i32 to index
      %c0_34 = arith.constant 0 : index
      %59 = vector.load %arg7[%58, %c0_34] : memref<128x128xf32, #tpu.memory_space<vmem>>, vector<8x128xf32>
      tpu.vector_store %arg7[%58, %c0_34], %57 {strides = array<i32>} : memref<128x128xf32, #tpu.memory_space<vmem>>, vector<8x128xf32>,
      scf.yield %57, %55 : vector<8x128xf32>, vector<8x128xf32>
    }
    %c16_i32_10 = arith.constant 16 : i32
    %cst_11 = arith.constant 0.000000e+00 : f32
    %12 = vector.broadcast %cst_11 : f32 to vector<8x128xf32>
    %c0_i32_12 = arith.constant 0 : i32
    %c16_i32_13 = arith.constant 16 : i32
    %13 = arith.addi %c0_i32_12, %c16_i32_13 : i32
    %c1_i32_14 = arith.constant 1 : i32
    %14 = scf.for %arg9 = %c0_i32_12 to %13 step %c1_i32_14 iter_args(%arg10 = %12) -> (vector<8x128xf32>)  : i32 {
      %c8_i32 = arith.constant 8 : i32
      %19 = arith.muli %arg9, %c8_i32 : i32
      %20 = tpu.assume_multiple %19, 8 : i32
      %21 = arith.index_cast %20 : i32 to index
      %c0_20 = arith.constant 0 : index
      %22 = vector.load %arg7[%21, %c0_20] : memref<128x128xf32, #tpu.memory_space<vmem>>, vector<8x128xf32>
      %23 = arith.index_cast %arg9 : i32 to index
      %c0_21 = arith.constant 0 : index
      %c0_22 = arith.constant 0 : index
      %24 = vector.load %arg4[%23, %c0_21, %c0_22] : memref<16x128x128xf32, #tpu.memory_space<vmem>>, vector<1x128x128xf32>
      %25 = vector.shape_cast %24 : vector<1x128x128xf32> to vector<128x128xf32>
      %cst_23 = arith.constant dense<0.000000e+00> : vector<8x128xf32>
      %26 = tpu.matmul %22, %25, %cst_23 {dimension_numbers = #tpu.dot_dimension_numbers<[1], [0], [0], [1], [0, 0, 1, 1], [], []>} : vector<8x128xf32>, vector<128x128xf32>, vector<8x128xf32> -> vector<8x128xf32>
      %27 = arith.addf %arg10, %26 : vector<8x128xf32>
      scf.yield %27 : vector<8x128xf32>
    }
    %c16_i32_15 = arith.constant 16 : i32
    %c0_16 = arith.constant 0 : index
    %c0_17 = arith.constant 0 : index
    %15 = vector.load %arg5[%c0_16, %c0_17] : memref<1x128xf32, #tpu.memory_space<vmem>>, vector<1x128xf32>
    %16 = vector.broadcast %15 : vector<1x128xf32> to vector<8x128xf32>
    %17 = arith.addf %14, %16 : vector<8x128xf32>
    %c0_18 = arith.constant 0 : index
    %c0_19 = arith.constant 0 : index
    %18 = vector.load %arg6[%c0_18, %c0_19] : memref<8x128xf32, #tpu.memory_space<vmem>>, vector<8x128xf32>
    tpu.vector_store %arg6[%c0_18, %c0_19], %17 {strides = array<i32>} : memref<8x128xf32, #tpu.memory_space<vmem>>, vector<8x128xf32>,
    return
  }
}

</mosaic_0001>

<llo_original>
// kernel: tpu_custom_call.1
$region0: #{tpu_custom_call.1}
  #allocation0 [shape = 'u32[]', space=smem, size = 0x4, offset = 0x4, fixed_abs, tag = 'smem constant byte address 0x4 - core index']
  #allocation1 [shape = 'u32[144,128]{1,0:T(1,128)}', space=vmem, size = 0x12000, scoped, tag = 'internal scratch']
  #allocation2 [shape = 'f32[128,128]{1,0:T(8,128)}', space=vmem, size = 0x10000, scoped, tag = 'scratch operand']
  #allocation3 [shape = 'f32[128,512]{1,0:T(8,128)}', space=vmem, size = 0x40000, scoped, tag = 'scratch operand']
  %s0 = inlined_call_operand.hbm [shape: f32[128,128], index: 0, kind: input, shape index: {}]
  %s1 = inlined_call_operand.hbm [shape: f32[1,128,512], index: 1, kind: input, shape index: {}]
  %s2 = inlined_call_operand.hbm [shape: f32[1,128,512], index: 2, kind: input, shape index: {}]
  %s3 = inlined_call_operand.vmem [shape: f32[1,1,512], index: 3, kind: input, shape index: {}]
  %s4 = inlined_call_operand.hbm [shape: f32[16,128,128], index: 4, kind: input, shape index: {}]
  %s5 = inlined_call_operand.vmem [shape: f32[1,128], index: 5, kind: input, shape index: {}]
  %s6 = inlined_call_operand.hbm [shape: f32[8,128], index: 6, kind: output, shape index: {}]
  %s7 = sld [smem:[#allocation0]]
  $region64: #{tpu_custom_call.1} parent=0
    _
  %s9 = ssub.s32 1, %s7
  %s10 = scalar_select 0, %s9, %s7
  $region1: #{tpu_custom_call.1} parent=0
    #allocation4 [shape = 'u8[65536]{0}', space=vmem, size = 0x10000, scoped, tag = 'input window, operand 0, single buffered']
    #allocation5 [shape = 's32[1]{0}', space=sflag, size = 0x4, scoped, tag = 'scoped memory for tpu_custom_call.1']
    #allocation6 [shape = 's32[1]{0}', space=sflag, size = 0x4, scoped, tag = 'scoped memory for tpu_custom_call.1']
    #allocation7 [shape = 'u8[262144]{0}', space=vmem, size = 0x40000, scoped, tag = 'input window, operand 1, single buffered']
    #allocation8 [shape = 's32[1]{0}', space=sflag, size = 0x4, scoped, tag = 'scoped memory for tpu_custom_call.1']
    #allocation9 [shape = 'u8[262144]{0}', space=vmem, size = 0x40000, scoped, tag = 'input window, operand 2, single buffered']
    #allocation10 [shape = 'u8[1048576]{0}', space=vmem, size = 0x100000, scoped, tag = 'input window, operand 4, single buffered']
    #allocation11 [shape = 's32[1]{0}', space=sflag, size = 0x4, scoped, tag = 'scoped memory for tpu_custom_call.1']
    #allocation12 [shape = 'u8[4096]{0}', space=vmem, size = 0x1000, scoped, tag = 'output window, operand 0, single buffered']
    %11 = vsyncpa [#allocation5], 0
    %12 = vsyncpa [#allocation8], 0
    %13 = vsyncpa [#allocation11], 0
    %14 = vsyncpa [#allocation6], 0
    // Predicated region
    $region2: #{tpu_custom_call.1} parent=1 // pred_check
      _
    $region3: #{tpu_custom_call.1} parent=1 // pred_check_branch
      %16 = sbr.rel (0) target = $region5
    $region4: #{tpu_custom_call.1} parent=1 // pred_region
      %s18 = ssub.s32 2048, 2048
      %19 = vsyncadd [#allocation5], %s18
      %s20 = sshll.u32 [#allocation4], 4
      %s21 = int_to_ptr.vmem [resolvable:$true] %s20
      %26 = dma.hbm_to_vmem [thread:$0]  %s0, 2048, %s21, [#allocation5], 128, 128, 8
    $region5: #{tpu_custom_call.1} parent=1 // pred_fallthru
      _
    // Predicated region
    $region6: #{tpu_custom_call.1} parent=1 // pred_check
      _
    $region7: #{tpu_custom_call.1} parent=1 // pred_check_branch
      %28 = sbr.rel (0) target = $region9
    $region8: #{tpu_custom_call.1} parent=1 // pred_region
      %s30 = ssub.s32 8192, 8192
      %31 = vsyncadd [#allocation8], %s30
      %s32 = sshll.u32 [#allocation7], 4
      %s33 = int_to_ptr.vmem [resolvable:$true] %s32
      %38 = dma.hbm_to_vmem [thread:$0]  %s1, 8192, %s33, [#allocation8], 512, 512, 32
    $region9: #{tpu_custom_call.1} parent=1 // pred_fallthru
      _
    // Predicated region
    $region10: #{tpu_custom_call.1} parent=1 // pred_check
      _
    $region11: #{tpu_custom_call.1} parent=1 // pred_check_branch
      %40 = sbr.rel (0) target = $region13
    $region12: #{tpu_custom_call.1} parent=1 // pred_region
      %s42 = ssub.s32 8192, 8192
      %43 = vsyncadd [#allocation8], %s42
      %s44 = sshll.u32 [#allocation9], 4
      %s45 = int_to_ptr.vmem [resolvable:$true] %s44
      %50 = dma.hbm_to_vmem [thread:$0]  %s2, 8192, %s45, [#allocation8], 512, 512, 32
    $region13: #{tpu_custom_call.1} parent=1 // pred_fallthru
      _
    // Predicated region
    $region14: #{tpu_custom_call.1} parent=1 // pred_check
      _
    $region15: #{tpu_custom_call.1} parent=1 // pred_check_branch
      %52 = sbr.rel (0) target = $region17
    $region16: #{tpu_custom_call.1} parent=1 // pred_region
      _
    $region17: #{tpu_custom_call.1} parent=1 // pred_fallthru
      _
    // Predicated region
    $region18: #{tpu_custom_call.1} parent=1 // pred_check
      _
    $region19: #{tpu_custom_call.1} parent=1 // pred_check_branch
      %54 = sbr.rel (0) target = $region21
    $region20: #{tpu_custom_call.1} parent=1 // pred_region
      %s56 = ssub.s32 32768, 32768
      %57 = vsyncadd [#allocation11], %s56
      %s58 = sshll.u32 [#allocation10], 4
      %s59 = int_to_ptr.vmem [resolvable:$true] %s58
      %64 = dma.hbm_to_vmem [thread:$0]  %s4, 32768, %s59, [#allocation11], 128, 128, 8
    $region21: #{tpu_custom_call.1} parent=1 // pred_fallthru
      _
    // Predicated region
    $region22: #{tpu_custom_call.1} parent=1 // pred_check
      _
    $region23: #{tpu_custom_call.1} parent=1 // pred_check_branch
      %66 = sbr.rel (0) target = $region25
    $region24: #{tpu_custom_call.1} parent=1 // pred_region
      _
    $region25: #{tpu_custom_call.1} parent=1 // pred_fallthru
      _
    // Predicated region
    $region26: #{tpu_custom_call.1} parent=1 // pred_check
      _
    $region27: #{tpu_custom_call.1} parent=1 // pred_check_branch
      %68 = sbr.rel (0) target = $region29
    $region28: #{tpu_custom_call.1} parent=1 // pred_region
      %69 = dma.done [#allocation5], 2048
    $region29: #{tpu_custom_call.1} parent=1 // pred_fallthru
      _
    // Predicated region
    $region30: #{tpu_custom_call.1} parent=1 // pred_check
      _
    $region31: #{tpu_custom_call.1} parent=1 // pred_check_branch
      %71 = sbr.rel (0) target = $region33
    $region32: #{tpu_custom_call.1} parent=1 // pred_region
      %72 = dma.done [#allocation8], 8192
    $region33: #{tpu_custom_call.1} parent=1 // pred_fallthru
      _
    // Predicated region
    $region34: #{tpu_custom_call.1} parent=1 // pred_check
      _
    $region35: #{tpu_custom_call.1} parent=1 // pred_check_branch
      %74 = sbr.rel (0) target = $region37
    $region36: #{tpu_custom_call.1} parent=1 // pred_region
      %75 = dma.done [#allocation8], 8192
    $region37: #{tpu_custom_call.1} parent=1 // pred_fallthru
      _
    // Predicated region
    $region38: #{tpu_custom_call.1} parent=1 // pred_check
      _
    $region39: #{tpu_custom_call.1} parent=1 // pred_check_branch
      %77 = sbr.rel (0) target = $region41
    $region40: #{tpu_custom_call.1} parent=1 // pred_region
      %78 = dma.done [#allocation11], 32768
    $region41: #{tpu_custom_call.1} parent=1 // pred_fallthru
      _
    %v79 = vld [vmem:[#allocation4] sm:$0xff]
    %v80 = vld [vmem:[#allocation4 + $0x8] sm:$0xff]
    %v81 = vld [vmem:[#allocation4 + $0x10] sm:$0xff]
    %v82 = vld [vmem:[#allocation4 + $0x18] sm:$0xff]
    %v83 = vld [vmem:[#allocation4 + $0x20] sm:$0xff]
    %v84 = vld [vmem:[#allocation4 + $0x28] sm:$0xff]
    %v85 = vld [vmem:[#allocation4 + $0x30] sm:$0xff]
    %v86 = vld [vmem:[#allocation4 + $0x38] sm:$0xff]
    %v87 = vld [vmem:[#allocation4 + $0x40] sm:$0xff]
    %v88 = vld [vmem:[#allocation4 + $0x48] sm:$0xff]
    %v89 = vld [vmem:[#allocation4 + $0x50] sm:$0xff]
    %v90 = vld [vmem:[#allocation4 + $0x58] sm:$0xff]
    %v91 = vld [vmem:[#allocation4 + $0x60] sm:$0xff]
    %v92 = vld [vmem:[#allocation4 + $0x68] sm:$0xff]
    %v93 = vld [vmem:[#allocation4 + $0x70] sm:$0xff]
    %v94 = vld [vmem:[#allocation4 + $0x78] sm:$0xff]
    %v95 = vld [vmem:[#allocation7] sm:$0xff]
    %v96 = vld [vmem:[#allocation7 + $0x8] sm:$0xff]
    %v97 = vld [vmem:[#allocation7 + $0x10] sm:$0xff]
    %v98 = vld [vmem:[#allocation7 + $0x18] sm:$0xff]
    %v99 = vld [vmem:[#allocation7 + $0x20] sm:$0xff]
    %v100 = vld [vmem:[#allocation7 + $0x28] sm:$0xff]
    %v101 = vld [vmem:[#allocation7 + $0x30] sm:$0xff]
    %v102 = vld [vmem:[#allocation7 + $0x38] sm:$0xff]
    %v103 = vld [vmem:[#allocation7 + $0x40] sm:$0xff]
    %v104 = vld [vmem:[#allocation7 + $0x48] sm:$0xff]
    %v105 = vld [vmem:[#allocation7 + $0x50] sm:$0xff]
    %v106 = vld [vmem:[#allocation7 + $0x58] sm:$0xff]
    %v107 = vld [vmem:[#allocation7 + $0x60] sm:$0xff]
    %v108 = vld [vmem:[#allocation7 + $0x68] sm:$0xff]
    %v109 = vld [vmem:[#allocation7 + $0x70] sm:$0xff]
    %v110 = vld [vmem:[#allocation7 + $0x78] sm:$0xff]
    %v111 = vld [vmem:[#allocation7 + $0x80] sm:$0xff]
    %v112 = vld [vmem:[#allocation7 + $0x88] sm:$0xff]
    %v113 = vld [vmem:[#allocation7 + $0x90] sm:$0xff]
    %v114 = vld [vmem:[#allocation7 + $0x98] sm:$0xff]
    %v115 = vld [vmem:[#allocation7 + $0xa0] sm:$0xff]
    %v116 = vld [vmem:[#allocation7 + $0xa8] sm:$0xff]
    %v117 = vld [vmem:[#allocation7 + $0xb0] sm:$0xff]
    %v118 = vld [vmem:[#allocation7 + $0xb8] sm:$0xff]
    %v119 = vld [vmem:[#allocation7 + $0xc0] sm:$0xff]
    %v120 = vld [vmem:[#allocation7 + $0xc8] sm:$0xff]
    %v121 = vld [vmem:[#allocation7 + $0xd0] sm:$0xff]
    %v122 = vld [vmem:[#allocation7 + $0xd8] sm:$0xff]
    %v123 = vld [vmem:[#allocation7 + $0xe0] sm:$0xff]
    %v124 = vld [vmem:[#allocation7 + $0xe8] sm:$0xff]
    %v125 = vld [vmem:[#allocation7 + $0xf0] sm:$0xff]
    %v126 = vld [vmem:[#allocation7 + $0xf8] sm:$0xff]
    %v127 = vld [vmem:[#allocation7 + $0x100] sm:$0xff]
    %v128 = vld [vmem:[#allocation7 + $0x108] sm:$0xff]
    %v129 = vld [vmem:[#allocation7 + $0x110] sm:$0xff]
    %v130 = vld [vmem:[#allocation7 + $0x118] sm:$0xff]
    %v131 = vld [vmem:[#allocation7 + $0x120] sm:$0xff]
    %v132 = vld [vmem:[#allocation7 + $0x128] sm:$0xff]
    %v133 = vld [vmem:[#allocation7 + $0x130] sm:$0xff]
    %v134 = vld [vmem:[#allocation7 + $0x138] sm:$0xff]
    %v135 = vld [vmem:[#allocation7 + $0x140] sm:$0xff]
    %v136 = vld [vmem:[#allocation7 + $0x148] sm:$0xff]
    %v137 = vld [vmem:[#allocation7 + $0x150] sm:$0xff]
    %v138 = vld [vmem:[#allocation7 + $0x158] sm:$0xff]
    %v139 = vld [vmem:[#allocation7 + $0x160] sm:$0xff]
    %v140 = vld [vmem:[#allocation7 + $0x168] sm:$0xff]
    %v141 = vld [vmem:[#allocation7 + $0x170] sm:$0xff]
    %v142 = vld [vmem:[#allocation7 + $0x178] sm:$0xff]
    %v143 = vld [vmem:[#allocation7 + $0x180] sm:$0xff]
    %v144 = vld [vmem:[#allocation7 + $0x188] sm:$0xff]
    %v145 = vld [vmem:[#allocation7 + $0x190] sm:$0xff]
    %v146 = vld [vmem:[#allocation7 + $0x198] sm:$0xff]
    %v147 = vld [vmem:[#allocation7 + $0x1a0] sm:$0xff]
    %v148 = vld [vmem:[#allocation7 + $0x1a8] sm:$0xff]
    %v149 = vld [vmem:[#allocation7 + $0x1b0] sm:$0xff]
    %v150 = vld [vmem:[#allocation7 + $0x1b8] sm:$0xff]
    %v151 = vld [vmem:[#allocation7 + $0x1c0] sm:$0xff]
    %v152 = vld [vmem:[#allocation7 + $0x1c8] sm:$0xff]
    %v153 = vld [vmem:[#allocation7 + $0x1d0] sm:$0xff]
    %v154 = vld [vmem:[#allocation7 + $0x1d8] sm:$0xff]
    %v155 = vld [vmem:[#allocation7 + $0x1e0] sm:$0xff]
    %v156 = vld [vmem:[#allocation7 + $0x1e8] sm:$0xff]
    %v157 = vld [vmem:[#allocation7 + $0x1f0] sm:$0xff]
    %v158 = vld [vmem:[#allocation7 + $0x1f8] sm:$0xff]
    %v159 = vld [vmem:[%s3] sm:$0xf]
    %v161 = vlaneseq
    %v162 = vshrl.u32 %v161, 7
    %v163 = vsub.s32 0, %v162
    %v164 = vrot.slane %v159, %v163
    %v165 = vlaneseq
    %v166 = vshrl.u32 %v165, 7
    %v167 = vsub.s32 1, %v166
    %v168 = vrot.slane %v159, %v167
    %v169 = vlaneseq
    %v170 = vshrl.u32 %v169, 7
    %v171 = vsub.s32 2, %v170
    %v172 = vrot.slane %v159, %v171
    %v173 = vlaneseq
    %v174 = vshrl.u32 %v173, 7
    %v175 = vsub.s32 3, %v174
    %v176 = vrot.slane %v159, %v175
    %181 = vmatprep.subr.mxu0 %v96
    %182 = vmatpush1.msra.mxu0 %v95
    %183 = vmatprep.subr.mxu0 %v100
    %184 = vmatpush1.msra.mxu0 %v99
    %185 = vmatprep.subr.mxu0 %v104
    %186 = vmatpush1.msra.mxu0 %v103
    %187 = vmatprep.subr.mxu0 %v108
    %188 = vmatpush1.msra.mxu0 %v107
    %189 = vmatprep.subr.mxu0 %v112
    %190 = vmatpush1.msra.mxu0 %v111
    %191 = vmatprep.subr.mxu0 %v116
    %192 = vmatpush1.msra.mxu0 %v115
    %193 = vmatprep.subr.mxu0 %v120
    %194 = vmatpush1.msra.mxu0 %v119
    %195 = vmatprep.subr.mxu0 %v124
    %196 = vmatpush1.msra.mxu0 %v123
    %197 = vmatprep.subr.mxu0 %v128
    %198 = vmatpush1.msra.mxu0 %v127
    %199 = vmatprep.subr.mxu0 %v132
    %200 = vmatpush1.msra.mxu0 %v131
    %201 = vmatprep.subr.mxu0 %v136
    %202 = vmatpush1.msra.mxu0 %v135
    %203 = vmatprep.subr.mxu0 %v140
    %204 = vmatpush1.msra.mxu0 %v139
    %205 = vmatprep.subr.mxu0 %v144
    %206 = vmatpush1.msra.mxu0 %v143
    %207 = vmatprep.subr.mxu0 %v148
    %208 = vmatpush1.msra.mxu0 %v147
    %209 = vmatprep.subr.mxu0 %v152
    %210 = vmatpush1.msra.mxu0 %v151
    %211 = vmatprep.subr.mxu0 %v156
    %212 = vmatpush1.msra.mxu0 %v155
    %213 = vmatprep.subr.mxu0 0.0
    %214 = vmatpush1.msra.mxu0 0.0
    %215 = vmatprep.subr.mxu0 0.0
    %216 = vmatpush1.msra.mxu0 0.0
    %217 = vmatprep.subr.mxu0 0.0
    %218 = vmatpush1.msra.mxu0 0.0
    %219 = vmatprep.subr.mxu0 0.0
    %220 = vmatpush1.msra.mxu0 0.0
    %221 = vmatprep.subr.mxu0 0.0
    %222 = vmatpush1.msra.mxu0 0.0
    %223 = vmatprep.subr.mxu0 0.0
    %224 = vmatpush1.msra.mxu0 0.0
    %225 = vmatprep.subr.mxu0 0.0
    %226 = vmatpush1.msra.mxu0 0.0
    %227 = vmatprep.subr.mxu0 0.0
    %228 = vmatpush1.msra.mxu0 0.0
    %229 = vmatprep.subr.mxu0 0.0
    %230 = vmatpush1.msra.mxu0 0.0
    %231 = vmatprep.subr.mxu0 0.0
    %232 = vmatpush1.msra.mxu0 0.0
    %233 = vmatprep.subr.mxu0 0.0
    %234 = vmatpush1.msra.mxu0 0.0
    %235 = vmatprep.subr.mxu0 0.0
    %236 = vmatpush1.msra.mxu0 0.0
    %237 = vmatprep.subr.mxu0 0.0
    %238 = vmatpush1.msra.mxu0 0.0
    %239 = vmatprep.subr.mxu0 0.0
    %240 = vmatpush1.msra.mxu0 0.0
    %241 = vmatprep.subr.mxu0 0.0
    %242 = vmatpush1.msra.mxu0 0.0
    %243 = vmatprep.subr.mxu0 0.0
    %244 = vmatpush1.msra.mxu0 0.0
    %245 = vmatprep.mubr.f32.mxu0 0.0
    %246 = vmatmul.mubr.f32.gmra.mrb[0].mxu0 %v79
    %v247 = vpop.f32.mrb[0].mxu0
    %v248 = vadd.f32 %v164, %v247
    %v249 = vpop.f32.mrb[0].mxu0
    %v250 = vadd.f32 %v168, %v249
    %251 = vmatprep.mubr.f32.mxu0 0.0
    %252 = vmatmul.mubr.f32.gmra.mrb[0].mxu0 %v80
    %v253 = vpop.f32.mrb[0].mxu0
    %v254 = vadd.f32 %v164, %v253
    %v255 = vpop.f32.mrb[0].mxu0
    %v256 = vadd.f32 %v168, %v255
    %257 = vmatprep.mubr.f32.mxu0 0.0
    %258 = vmatmul.mubr.f32.gmra.mrb[0].mxu0 %v81
    %v259 = vpop.f32.mrb[0].mxu0
    %v260 = vadd.f32 %v164, %v259
    %v261 = vpop.f32.mrb[0].mxu0
    %v262 = vadd.f32 %v168, %v261
    %263 = vmatprep.mubr.f32.mxu0 0.0
    %264 = vmatmul.mubr.f32.gmra.mrb[0].mxu0 %v82
    %v265 = vpop.f32.mrb[0].mxu0
    %v266 = vadd.f32 %v164, %v265
    %v267 = vpop.f32.mrb[0].mxu0
    %v268 = vadd.f32 %v168, %v267
    %269 = vmatprep.mubr.f32.mxu0 0.0
    %270 = vmatmul.mubr.f32.gmra.mrb[0].mxu0 %v83
    %v271 = vpop.f32.mrb[0].mxu0
    %v272 = vadd.f32 %v164, %v271
    %v273 = vpop.f32.mrb[0].mxu0
    %v274 = vadd.f32 %v168, %v273
    %275 = vmatprep.mubr.f32.mxu0 0.0
    %276 = vmatmul.mubr.f32.gmra.mrb[0].mxu0 %v84
    %v277 = vpop.f32.mrb[0].mxu0
    %v278 = vadd.f32 %v164, %v277
    %v279 = vpop.f32.mrb[0].mxu0
    %v280 = vadd.f32 %v168, %v279
    %281 = vmatprep.mubr.f32.mxu0 0.0
    %282 = vmatmul.mubr.f32.gmra.mrb[0].mxu0 %v85
    %v283 = vpop.f32.mrb[0].mxu0
    %v284 = vadd.f32 %v164, %v283
    %v285 = vpop.f32.mrb[0].mxu0
    %v286 = vadd.f32 %v168, %v285
    %287 = vmatprep.mubr.f32.mxu0 0.0
    %288 = vmatmul.mubr.f32.gmra.mrb[0].mxu0 %v86
    %v289 = vpop.f32.mrb[0].mxu0
    %v290 = vadd.f32 %v164, %v289
    %v291 = vpop.f32.mrb[0].mxu0
    %v292 = vadd.f32 %v168, %v291
    %293 = vmatprep.mubr.f32.mxu0 0.0
    %294 = vmatmul.mubr.f32.gmra.mrb[0].mxu0 %v87
    %v295 = vpop.f32.mrb[0].mxu0
    %v296 = vadd.f32 %v164, %v295
    %v297 = vpop.f32.mrb[0].mxu0
    %v298 = vadd.f32 %v168, %v297
    %299 = vmatprep.mubr.f32.mxu0 0.0
    %300 = vmatmul.mubr.f32.gmra.mrb[0].mxu0 %v88
    %v301 = vpop.f32.mrb[0].mxu0
    %v302 = vadd.f32 %v164, %v301
    %v303 = vpop.f32.mrb[0].mxu0
    %v304 = vadd.f32 %v168, %v303
    %305 = vmatprep.mubr.f32.mxu0 0.0
    %306 = vmatmul.mubr.f32.gmra.mrb[0].mxu0 %v89
    %v307 = vpop.f32.mrb[0].mxu0
    %v308 = vadd.f32 %v164, %v307
    %v309 = vpop.f32.mrb[0].mxu0
    %v310 = vadd.f32 %v168, %v309
    %311 = vmatprep.mubr.f32.mxu0 0.0
    %312 = vmatmul.mubr.f32.gmra.mrb[0].mxu0 %v90
    %v313 = vpop.f32.mrb[0].mxu0
    %v314 = vadd.f32 %v164, %v313
    %v315 = vpop.f32.mrb[0].mxu0
    %v316 = vadd.f32 %v168, %v315
    %317 = vmatprep.mubr.f32.mxu0 0.0
    %318 = vmatmul.mubr.f32.gmra.mrb[0].mxu0 %v91
    %v319 = vpop.f32.mrb[0].mxu0
    %v320 = vadd.f32 %v164, %v319
    %v321 = vpop.f32.mrb[0].mxu0
    %v322 = vadd.f32 %v168, %v321
    %323 = vmatprep.mubr.f32.mxu0 0.0
    %324 = vmatmul.mubr.f32.gmra.mrb[0].mxu0 %v92
    %v325 = vpop.f32.mrb[0].mxu0
    %v326 = vadd.f32 %v164, %v325
    %v327 = vpop.f32.mrb[0].mxu0
    %v328 = vadd.f32 %v168, %v327
    %329 = vmatprep.mubr.f32.mxu0 0.0
    %330 = vmatmul.mubr.f32.gmra.mrb[0].mxu0 %v93
    %v331 = vpop.f32.mrb[0].mxu0
    %v332 = vadd.f32 %v164, %v331
    %v333 = vpop.f32.mrb[0].mxu0
    %v334 = vadd.f32 %v168, %v333
    %335 = vmatprep.mubr.f32.mxu0 0.0
    %336 = vmatmul.mubr.f32.gmra.mrb[0].mxu0 %v94
    %v337 = vpop.f32.mrb[0].mxu0
    %v338 = vadd.f32 %v164, %v337
    %v339 = vpop.f32.mrb[0].mxu0
    %v340 = vadd.f32 %v168, %v339
    %341 = vdwg.mxu0
    %342 = vmatprep.subr.mxu0 %v98
    %343 = vmatpush1.msra.mxu0 %v97
    %344 = vmatprep.subr.mxu0 %v102
    %345 = vmatpush1.msra.mxu0 %v101
    %346 = vmatprep.subr.mxu0 %v106
    %347 = vmatpush1.msra.mxu0 %v105
    %348 = vmatprep.subr.mxu0 %v110
    %349 = vmatpush1.msra.mxu0 %v109
    %350 = vmatprep.subr.mxu0 %v114
    %351 = vmatpush1.msra.mxu0 %v113
    %352 = vmatprep.subr.mxu0 %v118
    %353 = vmatpush1.msra.mxu0 %v117
    %354 = vmatprep.subr.mxu0 %v122
    %355 = vmatpush1.msra.mxu0 %v121
    %356 = vmatprep.subr.mxu0 %v126
    %357 = vmatpush1.msra.mxu0 %v125
    %358 = vmatprep.subr.mxu0 %v130
    %359 = vmatpush1.msra.mxu0 %v129
    %360 = vmatprep.subr.mxu0 %v134
    %361 = vmatpush1.msra.mxu0 %v133
    %362 = vmatprep.subr.mxu0 %v138
    %363 = vmatpush1.msra.mxu0 %v137
    %364 = vmatprep.subr.mxu0 %v142
    %365 = vmatpush1.msra.mxu0 %v141
    %366 = vmatprep.subr.mxu0 %v146
    %367 = vmatpush1.msra.mxu0 %v145
    %368 = vmatprep.subr.mxu0 %v150
    %369 = vmatpush1.msra.mxu0 %v149
    %370 = vmatprep.subr.mxu0 %v154
    %371 = vmatpush1.msra.mxu0 %v153
    %372 = vmatprep.subr.mxu0 %v158
    %373 = vmatpush1.msra.mxu0 %v157
    %374 = vmatprep.subr.mxu0 0.0
    %375 = vmatpush1.msra.mxu0 0.0
    %376 = vmatprep.subr.mxu0 0.0
    %377 = vmatpush1.msra.mxu0 0.0
    %378 = vmatprep.subr.mxu0 0.0
    %379 = vmatpush1.msra.mxu0 0.0
    %380 = vmatprep.subr.mxu0 0.0
    %381 = vmatpush1.msra.mxu0 0.0
    %382 = vmatprep.subr.mxu0 0.0
    %383 = vmatpush1.msra.mxu0 0.0
    %384 = vmatprep.subr.mxu0 0.0
    %385 = vmatpush1.msra.mxu0 0.0
    %386 = vmatprep.subr.mxu0 0.0
    %387 = vmatpush1.msra.mxu0 0.0
    %388 = vmatprep.subr.mxu0 0.0
    %389 = vmatpush1.msra.mxu0 0.0
    %390 = vmatprep.subr.mxu0 0.0
    %391 = vmatpush1.msra.mxu0 0.0
    %392 = vmatprep.subr.mxu0 0.0
    %393 = vmatpush1.msra.mxu0 0.0
    %394 = vmatprep.subr.mxu0 0.0
    %395 = vmatpush1.msra.mxu0 0.0
    %396 = vmatprep.subr.mxu0 0.0
    %397 = vmatpush1.msra.mxu0 0.0
    %398 = vmatprep.subr.mxu0 0.0
    %399 = vmatpush1.msra.mxu0 0.0
    %400 = vmatprep.subr.mxu0 0.0
    %401 = vmatpush1.msra.mxu0 0.0
    %402 = vmatprep.subr.mxu0 0.0
    %403 = vmatpush1.msra.mxu0 0.0
    %404 = vmatprep.subr.mxu0 0.0
    %405 = vmatpush1.msra.mxu0 0.0
    %406 = vmatprep.mubr.f32.mxu0 0.0
    %407 = vmatmul.mubr.f32.gmra.mrb[0].mxu0 %v79
    %v408 = vpop.f32.mrb[0].mxu0
    %v409 = vadd.f32 %v172, %v408
    %v410 = vpop.f32.mrb[0].mxu0
    %v411 = vadd.f32 %v176, %v410
    %412 = vmatprep.mubr.f32.mxu0 0.0
    %413 = vmatmul.mubr.f32.gmra.mrb[0].mxu0 %v80
    %v414 = vpop.f32.mrb[0].mxu0
    %v415 = vadd.f32 %v172, %v414
    %v416 = vpop.f32.mrb[0].mxu0
    %v417 = vadd.f32 %v176, %v416
    %418 = vmatprep.mubr.f32.mxu0 0.0
    %419 = vmatmul.mubr.f32.gmra.mrb[0].mxu0 %v81
    %v420 = vpop.f32.mrb[0].mxu0
    %v421 = vadd.f32 %v172, %v420
    %v422 = vpop.f32.mrb[0].mxu0
    %v423 = vadd.f32 %v176, %v422
    %424 = vmatprep.mubr.f32.mxu0 0.0
    %425 = vmatmul.mubr.f32.gmra.mrb[0].mxu0 %v82
    %v426 = vpop.f32.mrb[0].mxu0
    %v427 = vadd.f32 %v172, %v426
    %v428 = vpop.f32.mrb[0].mxu0
    %v429 = vadd.f32 %v176, %v428
    %430 = vmatprep.mubr.f32.mxu0 0.0
    %431 = vmatmul.mubr.f32.gmra.mrb[0].mxu0 %v83
    %v432 = vpop.f32.mrb[0].mxu0
    %v433 = vadd.f32 %v172, %v432
    %v434 = vpop.f32.mrb[0].mxu0
    %v435 = vadd.f32 %v176, %v434
    %436 = vmatprep.mubr.f32.mxu0 0.0
    %437 = vmatmul.mubr.f32.gmra.mrb[0].mxu0 %v84
    %v438 = vpop.f32.mrb[0].mxu0
    %v439 = vadd.f32 %v172, %v438
    %v440 = vpop.f32.mrb[0].mxu0
    %v441 = vadd.f32 %v176, %v440
    %442 = vmatprep.mubr.f32.mxu0 0.0
    %443 = vmatmul.mubr.f32.gmra.mrb[0].mxu0 %v85
    %v444 = vpop.f32.mrb[0].mxu0
    %v445 = vadd.f32 %v172, %v444
    %v446 = vpop.f32.mrb[0].mxu0
    %v447 = vadd.f32 %v176, %v446
    %448 = vmatprep.mubr.f32.mxu0 0.0
    %449 = vmatmul.mubr.f32.gmra.mrb[0].mxu0 %v86
    %v450 = vpop.f32.mrb[0].mxu0
    %v451 = vadd.f32 %v172, %v450
    %v452 = vpop.f32.mrb[0].mxu0
    %v453 = vadd.f32 %v176, %v452
    %454 = vmatprep.mubr.f32.mxu0 0.0
    %455 = vmatmul.mubr.f32.gmra.mrb[0].mxu0 %v87
    %v456 = vpop.f32.mrb[0].mxu0
    %v457 = vadd.f32 %v172, %v456
    %v458 = vpop.f32.mrb[0].mxu0
    %v459 = vadd.f32 %v176, %v458
    %460 = vmatprep.mubr.f32.mxu0 0.0
    %461 = vmatmul.mubr.f32.gmra.mrb[0].mxu0 %v88
    %v462 = vpop.f32.mrb[0].mxu0
    %v463 = vadd.f32 %v172, %v462
    %v464 = vpop.f32.mrb[0].mxu0
    %v465 = vadd.f32 %v176, %v464
    %466 = vmatprep.mubr.f32.mxu0 0.0
    %467 = vmatmul.mubr.f32.gmra.mrb[0].mxu0 %v89
    %v468 = vpop.f32.mrb[0].mxu0
    %v469 = vadd.f32 %v172, %v468
    %v470 = vpop.f32.mrb[0].mxu0
    %v471 = vadd.f32 %v176, %v470
    %472 = vmatprep.mubr.f32.mxu0 0.0
    %473 = vmatmul.mubr.f32.gmra.mrb[0].mxu0 %v90
    %v474 = vpop.f32.mrb[0].mxu0
    %v475 = vadd.f32 %v172, %v474
    %v476 = vpop.f32.mrb[0].mxu0
    %v477 = vadd.f32 %v176, %v476
    %478 = vmatprep.mubr.f32.mxu0 0.0
    %479 = vmatmul.mubr.f32.gmra.mrb[0].mxu0 %v91
    %v480 = vpop.f32.mrb[0].mxu0
    %v481 = vadd.f32 %v172, %v480
    %v482 = vpop.f32.mrb[0].mxu0
    %v483 = vadd.f32 %v176, %v482
    %484 = vmatprep.mubr.f32.mxu0 0.0
    %485 = vmatmul.mubr.f32.gmra.mrb[0].mxu0 %v92
    %v486 = vpop.f32.mrb[0].mxu0
    %v487 = vadd.f32 %v172, %v486
    %v488 = vpop.f32.mrb[0].mxu0
    %v489 = vadd.f32 %v176, %v488
    %490 = vmatprep.mubr.f32.mxu0 0.0
    %491 = vmatmul.mubr.f32.gmra.mrb[0].mxu0 %v93
    %v492 = vpop.f32.mrb[0].mxu0
    %v493 = vadd.f32 %v172, %v492
    %v494 = vpop.f32.mrb[0].mxu0
    %v495 = vadd.f32 %v176, %v494
    %496 = vmatprep.mubr.f32.mxu0 0.0
    %497 = vmatmul.mubr.f32.gmra.mrb[0].mxu0 %v94
    %v498 = vpop.f32.mrb[0].mxu0
    %v499 = vadd.f32 %v172, %v498
    %v500 = vpop.f32.mrb[0].mxu0
    %v501 = vadd.f32 %v176, %v500
    %502 = vdwg.mxu0
    %503 = vst [vmem:[#allocation3] sm:$0xff] %v248
    %504 = vst [vmem:[#allocation3 + $0x8] sm:$0xff] %v250
    %505 = vst [vmem:[#allocation3 + $0x10] sm:$0xff] %v409
    %506 = vst [vmem:[#allocation3 + $0x18] sm:$0xff] %v411
    %507 = vst [vmem:[#allocation3 + $0x20] sm:$0xff] %v254
    %508 = vst [vmem:[#allocation3 + $0x28] sm:$0xff] %v256
    %509 = vst [vmem:[#allocation3 + $0x30] sm:$0xff] %v415
    %510 = vst [vmem:[#allocation3 + $0x38] sm:$0xff] %v417
    %511 = vst [vmem:[#allocation3 + $0x40] sm:$0xff] %v260
    %512 = vst [vmem:[#allocation3 + $0x48] sm:$0xff] %v262
    %513 = vst [vmem:[#allocation3 + $0x50] sm:$0xff] %v421
    %514 = vst [vmem:[#allocation3 + $0x58] sm:$0xff] %v423
    %515 = vst [vmem:[#allocation3 + $0x60] sm:$0xff] %v266
    %516 = vst [vmem:[#allocation3 + $0x68] sm:$0xff] %v268
    %517 = vst [vmem:[#allocation3 + $0x70] sm:$0xff] %v427
    %518 = vst [vmem:[#allocation3 + $0x78] sm:$0xff] %v429
    %519 = vst [vmem:[#allocation3 + $0x80] sm:$0xff] %v272
    %520 = vst [vmem:[#allocation3 + $0x88] sm:$0xff] %v274
    %521 = vst [vmem:[#allocation3 + $0x90] sm:$0xff] %v433
    %522 = vst [vmem:[#allocation3 + $0x98] sm:$0xff] %v435
    %523 = vst [vmem:[#allocation3 + $0xa0] sm:$0xff] %v278
    %524 = vst [vmem:[#allocation3 + $0xa8] sm:$0xff] %v280
    %525 = vst [vmem:[#allocation3 + $0xb0] sm:$0xff] %v439
    %526 = vst [vmem:[#allocation3 + $0xb8] sm:$0xff] %v441
    %527 = vst [vmem:[#allocation3 + $0xc0] sm:$0xff] %v284
    %528 = vst [vmem:[#allocation3 + $0xc8] sm:$0xff] %v286
    %529 = vst [vmem:[#allocation3 + $0xd0] sm:$0xff] %v445
    %530 = vst [vmem:[#allocation3 + $0xd8] sm:$0xff] %v447
    %531 = vst [vmem:[#allocation3 + $0xe0] sm:$0xff] %v290
    %532 = vst [vmem:[#allocation3 + $0xe8] sm:$0xff] %v292
    %533 = vst [vmem:[#allocation3 + $0xf0] sm:$0xff] %v451
    %534 = vst [vmem:[#allocation3 + $0xf8] sm:$0xff] %v453
    %535 = vst [vmem:[#allocation3 + $0x100] sm:$0xff] %v296
    %536 = vst [vmem:[#allocation3 + $0x108] sm:$0xff] %v298
    %537 = vst [vmem:[#allocation3 + $0x110] sm:$0xff] %v457
    %538 = vst [vmem:[#allocation3 + $0x118] sm:$0xff] %v459
    %539 = vst [vmem:[#allocation3 + $0x120] sm:$0xff] %v302
    %540 = vst [vmem:[#allocation3 + $0x128] sm:$0xff] %v304
    %541 = vst [vmem:[#allocation3 + $0x130] sm:$0xff] %v463
    %542 = vst [vmem:[#allocation3 + $0x138] sm:$0xff] %v465
    %543 = vst [vmem:[#allocation3 + $0x140] sm:$0xff] %v308
    %544 = vst [vmem:[#allocation3 + $0x148] sm:$0xff] %v310
    %545 = vst [vmem:[#allocation3 + $0x150] sm:$0xff] %v469
    %546 = vst [vmem:[#allocation3 + $0x158] sm:$0xff] %v471
    %547 = vst [vmem:[#allocation3 + $0x160] sm:$0xff] %v314
    %548 = vst [vmem:[#allocation3 + $0x168] sm:$0xff] %v316
    %549 = vst [vmem:[#allocation3 + $0x170] sm:$0xff] %v475
    %550 = vst [vmem:[#allocation3 + $0x178] sm:$0xff] %v477
    %551 = vst [vmem:[#allocation3 + $0x180] sm:$0xff] %v320
    %552 = vst [vmem:[#allocation3 + $0x188] sm:$0xff] %v322
    %553 = vst [vmem:[#allocation3 + $0x190] sm:$0xff] %v481
    %554 = vst [vmem:[#allocation3 + $0x198] sm:$0xff] %v483
    %555 = vst [vmem:[#allocation3 + $0x1a0] sm:$0xff] %v326
    %556 = vst [vmem:[#allocation3 + $0x1a8] sm:$0xff] %v328
    %557 = vst [vmem:[#allocation3 + $0x1b0] sm:$0xff] %v487
    %558 = vst [vmem:[#allocation3 + $0x1b8] sm:$0xff] %v489
    %559 = vst [vmem:[#allocation3 + $0x1c0] sm:$0xff] %v332
    %560 = vst [vmem:[#allocation3 + $0x1c8] sm:$0xff] %v334
    %561 = vst [vmem:[#allocation3 + $0x1d0] sm:$0xff] %v493
    %562 = vst [vmem:[#allocation3 + $0x1d8] sm:$0xff] %v495
    %563 = vst [vmem:[#allocation3 + $0x1e0] sm:$0xff] %v338
    %564 = vst [vmem:[#allocation3 + $0x1e8] sm:$0xff] %v340
    %565 = vst [vmem:[#allocation3 + $0x1f0] sm:$0xff] %v499
    %566 = vst [vmem:[#allocation3 + $0x1f8] sm:$0xff] %v501
    loop: start=0, step=1, limit=16
    $region42: #{tpu_custom_call.1} parent=1 // loop_pre_header
      _
    $region43: #{tpu_custom_call.1} parent=1 // loop_header
      %s568 = sphi 0, %s572
      %p569 = scmp.ge.s32.totalorder %s568, 16
      %v573 = vphi 0.0, %v818
      %v574 = vphi 0.0, %v816
    $region44: #{tpu_custom_call.1} parent=1 // loop_header_branch
      %571 = sbr.rel (%p569) target = $region48
    $region45: #{tpu_custom_call.1} parent=1 // loop_body
      %s575 = smul.u32 %s568, 8
      %s576 = sshra.s32 %s575, 3
      %s577 = sand.u32 %s575, 7
      %s578 = smul.u32 %s576, 4
      %s579 = smul.addr %s578, 8
      %s580 = scalar_lea.vmem [#allocation3], %s579
      %v581 = vld [vmem:[%s580] sm:$0xff]
      %v582 = vld [vmem:[%s580 + $0x8] sm:$0xff]
      %v583 = vld [vmem:[%s580 + $0x10] sm:$0xff]
      %v584 = vld [vmem:[%s580 + $0x18] sm:$0xff]
      %v585 = vld [vmem:[#allocation9] sm:$0xff]
      %v586 = vld [vmem:[#allocation9 + $0x8] sm:$0xff]
      %v587 = vld [vmem:[#allocation9 + $0x10] sm:$0xff]
      %v588 = vld [vmem:[#allocation9 + $0x18] sm:$0xff]
      %v589 = vld [vmem:[#allocation9 + $0x20] sm:$0xff]
      %v590 = vld [vmem:[#allocation9 + $0x28] sm:$0xff]
      %v591 = vld [vmem:[#allocation9 + $0x30] sm:$0xff]
      %v592 = vld [vmem:[#allocation9 + $0x38] sm:$0xff]
      %v593 = vld [vmem:[#allocation9 + $0x40] sm:$0xff]
      %v594 = vld [vmem:[#allocation9 + $0x48] sm:$0xff]
      %v595 = vld [vmem:[#allocation9 + $0x50] sm:$0xff]
      %v596 = vld [vmem:[#allocation9 + $0x58] sm:$0xff]
      %v597 = vld [vmem:[#allocation9 + $0x60] sm:$0xff]
      %v598 = vld [vmem:[#allocation9 + $0x68] sm:$0xff]
      %v599 = vld [vmem:[#allocation9 + $0x70] sm:$0xff]
      %v600 = vld [vmem:[#allocation9 + $0x78] sm:$0xff]
      %v601 = vld [vmem:[#allocation9 + $0x80] sm:$0xff]
      %v602 = vld [vmem:[#allocation9 + $0x88] sm:$0xff]
      %v603 = vld [vmem:[#allocation9 + $0x90] sm:$0xff]
      %v604 = vld [vmem:[#allocation9 + $0x98] sm:$0xff]
      %v605 = vld [vmem:[#allocation9 + $0xa0] sm:$0xff]
      %v606 = vld [vmem:[#allocation9 + $0xa8] sm:$0xff]
      %v607 = vld [vmem:[#allocation9 + $0xb0] sm:$0xff]
      %v608 = vld [vmem:[#allocation9 + $0xb8] sm:$0xff]
      %v609 = vld [vmem:[#allocation9 + $0xc0] sm:$0xff]
      %v610 = vld [vmem:[#allocation9 + $0xc8] sm:$0xff]
      %v611 = vld [vmem:[#allocation9 + $0xd0] sm:$0xff]
      %v612 = vld [vmem:[#allocation9 + $0xd8] sm:$0xff]
      %v613 = vld [vmem:[#allocation9 + $0xe0] sm:$0xff]
      %v614 = vld [vmem:[#allocation9 + $0xe8] sm:$0xff]
      %v615 = vld [vmem:[#allocation9 + $0xf0] sm:$0xff]
      %v616 = vld [vmem:[#allocation9 + $0xf8] sm:$0xff]
      %v617 = vld [vmem:[#allocation9 + $0x100] sm:$0xff]
      %v618 = vld [vmem:[#allocation9 + $0x108] sm:$0xff]
      %v619 = vld [vmem:[#allocation9 + $0x110] sm:$0xff]
      %v620 = vld [vmem:[#allocation9 + $0x118] sm:$0xff]
      %v621 = vld [vmem:[#allocation9 + $0x120] sm:$0xff]
      %v622 = vld [vmem:[#allocation9 + $0x128] sm:$0xff]
      %v623 = vld [vmem:[#allocation9 + $0x130] sm:$0xff]
      %v624 = vld [vmem:[#allocation9 + $0x138] sm:$0xff]
      %v625 = vld [vmem:[#allocation9 + $0x140] sm:$0xff]
      %v626 = vld [vmem:[#allocation9 + $0x148] sm:$0xff]
      %v627 = vld [vmem:[#allocation9 + $0x150] sm:$0xff]
      %v628 = vld [vmem:[#allocation9 + $0x158] sm:$0xff]
      %v629 = vld [vmem:[#allocation9 + $0x160] sm:$0xff]
      %v630 = vld [vmem:[#allocation9 + $0x168] sm:$0xff]
      %v631 = vld [vmem:[#allocation9 + $0x170] sm:$0xff]
      %v632 = vld [vmem:[#allocation9 + $0x178] sm:$0xff]
      %v633 = vld [vmem:[#allocation9 + $0x180] sm:$0xff]
      %v634 = vld [vmem:[#allocation9 + $0x188] sm:$0xff]
      %v635 = vld [vmem:[#allocation9 + $0x190] sm:$0xff]
      %v636 = vld [vmem:[#allocation9 + $0x198] sm:$0xff]
      %v637 = vld [vmem:[#allocation9 + $0x1a0] sm:$0xff]
      %v638 = vld [vmem:[#allocation9 + $0x1a8] sm:$0xff]
      %v639 = vld [vmem:[#allocation9 + $0x1b0] sm:$0xff]
      %v640 = vld [vmem:[#allocation9 + $0x1b8] sm:$0xff]
      %v641 = vld [vmem:[#allocation9 + $0x1c0] sm:$0xff]
      %v642 = vld [vmem:[#allocation9 + $0x1c8] sm:$0xff]
      %v643 = vld [vmem:[#allocation9 + $0x1d0] sm:$0xff]
      %v644 = vld [vmem:[#allocation9 + $0x1d8] sm:$0xff]
      %v645 = vld [vmem:[#allocation9 + $0x1e0] sm:$0xff]
      %v646 = vld [vmem:[#allocation9 + $0x1e8] sm:$0xff]
      %v647 = vld [vmem:[#allocation9 + $0x1f0] sm:$0xff]
      %v648 = vld [vmem:[#allocation9 + $0x1f8] sm:$0xff]
      %649 = vmatprep.subr.mxu0 %v586
      %650 = vmatpush1.msra.mxu0 %v585
      %651 = vmatprep.subr.mxu0 %v590
      %652 = vmatpush1.msra.mxu0 %v589
      %653 = vmatprep.subr.mxu0 %v594
      %654 = vmatpush1.msra.mxu0 %v593
      %655 = vmatprep.subr.mxu0 %v598
      %656 = vmatpush1.msra.mxu0 %v597
      %657 = vmatprep.subr.mxu0 %v602
      %658 = vmatpush1.msra.mxu0 %v601
      %659 = vmatprep.subr.mxu0 %v606
      %660 = vmatpush1.msra.mxu0 %v605
      %661 = vmatprep.subr.mxu0 %v610
      %662 = vmatpush1.msra.mxu0 %v609
      %663 = vmatprep.subr.mxu0 %v614
      %664 = vmatpush1.msra.mxu0 %v613
      %665 = vmatprep.subr.mxu0 %v618
      %666 = vmatpush1.msra.mxu0 %v617
      %667 = vmatprep.subr.mxu0 %v622
      %668 = vmatpush1.msra.mxu0 %v621
      %669 = vmatprep.subr.mxu0 %v626
      %670 = vmatpush1.msra.mxu0 %v625
      %671 = vmatprep.subr.mxu0 %v630
      %672 = vmatpush1.msra.mxu0 %v629
      %673 = vmatprep.subr.mxu0 %v634
      %674 = vmatpush1.msra.mxu0 %v633
      %675 = vmatprep.subr.mxu0 %v638
      %676 = vmatpush1.msra.mxu0 %v637
      %677 = vmatprep.subr.mxu0 %v642
      %678 = vmatpush1.msra.mxu0 %v641
      %679 = vmatprep.subr.mxu0 %v646
      %680 = vmatpush1.msra.mxu0 %v645
      %681 = vmatprep.subr.mxu0 0.0
      %682 = vmatpush1.msra.mxu0 0.0
      %683 = vmatprep.subr.mxu0 0.0
      %684 = vmatpush1.msra.mxu0 0.0
      %685 = vmatprep.subr.mxu0 0.0
      %686 = vmatpush1.msra.mxu0 0.0
      %687 = vmatprep.subr.mxu0 0.0
      %688 = vmatpush1.msra.mxu0 0.0
      %689 = vmatprep.subr.mxu0 0.0
      %690 = vmatpush1.msra.mxu0 0.0
      %691 = vmatprep.subr.mxu0 0.0
      %692 = vmatpush1.msra.mxu0 0.0
      %693 = vmatprep.subr.mxu0 0.0
      %694 = vmatpush1.msra.mxu0 0.0
      %695 = vmatprep.subr.mxu0 0.0
      %696 = vmatpush1.msra.mxu0 0.0
      %697 = vmatprep.subr.mxu0 0.0
      %698 = vmatpush1.msra.mxu0 0.0
      %699 = vmatprep.subr.mxu0 0.0
      %700 = vmatpush1.msra.mxu0 0.0
      %701 = vmatprep.subr.mxu0 0.0
      %702 = vmatpush1.msra.mxu0 0.0
      %703 = vmatprep.subr.mxu0 0.0
      %704 = vmatpush1.msra.mxu0 0.0
      %705 = vmatprep.subr.mxu0 0.0
      %706 = vmatpush1.msra.mxu0 0.0
      %707 = vmatprep.subr.mxu0 0.0
      %708 = vmatpush1.msra.mxu0 0.0
      %709 = vmatprep.subr.mxu0 0.0
      %710 = vmatpush1.msra.mxu0 0.0
      %711 = vmatprep.subr.mxu0 0.0
      %712 = vmatpush1.msra.mxu0 0.0
      %713 = vmatprep.mubr.f32.mxu0 0.0
      %714 = vmatmul.mubr.f32.gmra.mrb[0].mxu0 %v573
      %v715 = vpop.f32.mrb[0].mxu0
      %v716 = vadd.f32 0.0, %v715
      %v717 = vpop.f32.mrb[0].mxu0
      %v718 = vadd.f32 0.0, %v717
      %719 = vdwg.mxu0
      %720 = vmatprep.subr.mxu0 %v588
      %721 = vmatpush1.msra.mxu0 %v587
      %722 = vmatprep.subr.mxu0 %v592
      %723 = vmatpush1.msra.mxu0 %v591
      %724 = vmatprep.subr.mxu0 %v596
      %725 = vmatpush1.msra.mxu0 %v595
      %726 = vmatprep.subr.mxu0 %v600
      %727 = vmatpush1.msra.mxu0 %v599
      %728 = vmatprep.subr.mxu0 %v604
      %729 = vmatpush1.msra.mxu0 %v603
      %730 = vmatprep.subr.mxu0 %v608
      %731 = vmatpush1.msra.mxu0 %v607
      %732 = vmatprep.subr.mxu0 %v612
      %733 = vmatpush1.msra.mxu0 %v611
      %734 = vmatprep.subr.mxu0 %v616
      %735 = vmatpush1.msra.mxu0 %v615
      %736 = vmatprep.subr.mxu0 %v620
      %737 = vmatpush1.msra.mxu0 %v619
      %738 = vmatprep.subr.mxu0 %v624
      %739 = vmatpush1.msra.mxu0 %v623
      %740 = vmatprep.subr.mxu0 %v628
      %741 = vmatpush1.msra.mxu0 %v627
      %742 = vmatprep.subr.mxu0 %v632
      %743 = vmatpush1.msra.mxu0 %v631
      %744 = vmatprep.subr.mxu0 %v636
      %745 = vmatpush1.msra.mxu0 %v635
      %746 = vmatprep.subr.mxu0 %v640
      %747 = vmatpush1.msra.mxu0 %v639
      %748 = vmatprep.subr.mxu0 %v644
      %749 = vmatpush1.msra.mxu0 %v643
      %750 = vmatprep.subr.mxu0 %v648
      %751 = vmatpush1.msra.mxu0 %v647
      %752 = vmatprep.subr.mxu0 0.0
      %753 = vmatpush1.msra.mxu0 0.0
      %754 = vmatprep.subr.mxu0 0.0
      %755 = vmatpush1.msra.mxu0 0.0
      %756 = vmatprep.subr.mxu0 0.0
      %757 = vmatpush1.msra.mxu0 0.0
      %758 = vmatprep.subr.mxu0 0.0
      %759 = vmatpush1.msra.mxu0 0.0
      %760 = vmatprep.subr.mxu0 0.0
      %761 = vmatpush1.msra.mxu0 0.0
      %762 = vmatprep.subr.mxu0 0.0
      %763 = vmatpush1.msra.mxu0 0.0
      %764 = vmatprep.subr.mxu0 0.0
      %765 = vmatpush1.msra.mxu0 0.0
      %766 = vmatprep.subr.mxu0 0.0
      %767 = vmatpush1.msra.mxu0 0.0
      %768 = vmatprep.subr.mxu0 0.0
      %769 = vmatpush1.msra.mxu0 0.0
      %770 = vmatprep.subr.mxu0 0.0
      %771 = vmatpush1.msra.mxu0 0.0
      %772 = vmatprep.subr.mxu0 0.0
      %773 = vmatpush1.msra.mxu0 0.0
      %774 = vmatprep.subr.mxu0 0.0
      %775 = vmatpush1.msra.mxu0 0.0
      %776 = vmatprep.subr.mxu0 0.0
      %777 = vmatpush1.msra.mxu0 0.0
      %778 = vmatprep.subr.mxu0 0.0
      %779 = vmatpush1.msra.mxu0 0.0
      %780 = vmatprep.subr.mxu0 0.0
      %781 = vmatpush1.msra.mxu0 0.0
      %782 = vmatprep.subr.mxu0 0.0
      %783 = vmatpush1.msra.mxu0 0.0
      %784 = vmatprep.mubr.f32.mxu0 0.0
      %785 = vmatmul.mubr.f32.gmra.mrb[0].mxu0 %v573
      %v786 = vpop.f32.mrb[0].mxu0
      %v787 = vadd.f32 0.0, %v786
      %v788 = vpop.f32.mrb[0].mxu0
      %v789 = vadd.f32 0.0, %v788
      %790 = vdwg.mxu0
      %v791 = vadd.f32 %v581, %v716
      %v792 = vadd.f32 %v582, %v718
      %v793 = vadd.f32 %v583, %v787
      %v794 = vadd.f32 %v584, %v789
      %v795 = vsub.f32 0.0, %v791
      %v796 = vmul.f32 %v795, 1.442695
      %v797 = vpow.pop %v796
      %v798 = vadd.f32 %v797, 1.0
      %v799 = vrcp.pop %v798
      %v800 = vmul.f32 1.0, %v799
      %v801 = vsub.f32 0.0, %v792
      %v802 = vmul.f32 %v801, 1.442695
      %v803 = vpow.pop %v802
      %v804 = vadd.f32 %v803, 1.0
      %v805 = vrcp.pop %v804
      %v806 = vmul.f32 1.0, %v805
      %v807 = vtanh.pop %v793
      %v808 = vsub.f32 0.0, %v794
      %v809 = vmul.f32 %v808, 1.442695
      %v810 = vpow.pop %v809
      %v811 = vadd.f32 %v810, 1.0
      %v812 = vrcp.pop %v811
      %v813 = vmul.f32 1.0, %v812
      %v814 = vmul.f32 %v806, %v574
      %v815 = vmul.f32 %v800, %v807
      %v816 = vadd.f32 %v814, %v815
      %v817 = vtanh.pop %v816
      %v818 = vmul.f32 %v813, %v817
      %s819 = scalar_lea.vmem [#allocation2], %s575
      %820 = vst [vmem:[%s819] sm:$0xff] %v818
    $region46: #{tpu_custom_call.1} parent=1 // loop_footer
      %s572 = sadd.s32 1, %s568
    $region47: #{tpu_custom_call.1} parent=1 // loop_footer_branch
      %567 = sbr.rel target = $region43
    $region48: #{tpu_custom_call.1} parent=1 // loop_exit
      _
    loop: start=0, step=1, limit=16
    $region49: #{tpu_custom_call.1} parent=1 // loop_pre_header
      _
    $region50: #{tpu_custom_call.1} parent=1 // loop_header
      %s822 = sphi 0, %s826
      %p823 = scmp.ge.s32.totalorder %s822, 16
      %v827 = vphi 0.0, %v919
    $region51: #{tpu_custom_call.1} parent=1 // loop_header_branch
      %825 = sbr.rel (%p823) target = $region55
    $region52: #{tpu_custom_call.1} parent=1 // loop_body
      %s828 = smul.u32 %s822, 8
      %s829 = scalar_lea.vmem [#allocation2], %s828
      %v830 = vld [vmem:[%s829] sm:$0xff]
      %s831 = smul.u32 %s822, 128
      %s832 = scalar_lea.vmem [#allocation10], %s831
      %v833 = vld [vmem:[%s832] sm:$0xff]
      %v834 = vld [vmem:[%s832 + $0x8] sm:$0xff]
      %v835 = vld [vmem:[%s832 + $0x10] sm:$0xff]
      %v836 = vld [vmem:[%s832 + $0x18] sm:$0xff]
      %v837 = vld [vmem:[%s832 + $0x20] sm:$0xff]
      %v838 = vld [vmem:[%s832 + $0x28] sm:$0xff]
      %v839 = vld [vmem:[%s832 + $0x30] sm:$0xff]
      %v840 = vld [vmem:[%s832 + $0x38] sm:$0xff]
      %v841 = vld [vmem:[%s832 + $0x40] sm:$0xff]
      %v842 = vld [vmem:[%s832 + $0x48] sm:$0xff]
      %v843 = vld [vmem:[%s832 + $0x50] sm:$0xff]
      %v844 = vld [vmem:[%s832 + $0x58] sm:$0xff]
      %v845 = vld [vmem:[%s832 + $0x60] sm:$0xff]
      %v846 = vld [vmem:[%s832 + $0x68] sm:$0xff]
      %v847 = vld [vmem:[%s832 + $0x70] sm:$0xff]
      %v848 = vld [vmem:[%s832 + $0x78] sm:$0xff]
      %849 = vmatprep.subr.mxu0 0.0
      %850 = vmatpush1.msra.mxu0 %v833
      %851 = vmatprep.subr.mxu0 0.0
      %852 = vmatpush1.msra.mxu0 %v834
      %853 = vmatprep.subr.mxu0 0.0
      %854 = vmatpush1.msra.mxu0 %v835
      %855 = vmatprep.subr.mxu0 0.0
      %856 = vmatpush1.msra.mxu0 %v836
      %857 = vmatprep.subr.mxu0 0.0
      %858 = vmatpush1.msra.mxu0 %v837
      %859 = vmatprep.subr.mxu0 0.0
      %860 = vmatpush1.msra.mxu0 %v838
      %861 = vmatprep.subr.mxu0 0.0
      %862 = vmatpush1.msra.mxu0 %v839
      %863 = vmatprep.subr.mxu0 0.0
      %864 = vmatpush1.msra.mxu0 %v840
      %865 = vmatprep.subr.mxu0 0.0
      %866 = vmatpush1.msra.mxu0 %v841
      %867 = vmatprep.subr.mxu0 0.0
      %868 = vmatpush1.msra.mxu0 %v842
      %869 = vmatprep.subr.mxu0 0.0
      %870 = vmatpush1.msra.mxu0 %v843
      %871 = vmatprep.subr.mxu0 0.0
      %872 = vmatpush1.msra.mxu0 %v844
      %873 = vmatprep.subr.mxu0 0.0
      %874 = vmatpush1.msra.mxu0 %v845
      %875 = vmatprep.subr.mxu0 0.0
      %876 = vmatpush1.msra.mxu0 %v846
      %877 = vmatprep.subr.mxu0 0.0
      %878 = vmatpush1.msra.mxu0 %v847
      %879 = vmatprep.subr.mxu0 0.0
      %880 = vmatpush1.msra.mxu0 %v848
      %881 = vmatprep.subr.mxu0 0.0
      %882 = vmatpush1.msra.mxu0 0.0
      %883 = vmatprep.subr.mxu0 0.0
      %884 = vmatpush1.msra.mxu0 0.0
      %885 = vmatprep.subr.mxu0 0.0
      %886 = vmatpush1.msra.mxu0 0.0
      %887 = vmatprep.subr.mxu0 0.0
      %888 = vmatpush1.msra.mxu0 0.0
      %889 = vmatprep.subr.mxu0 0.0
      %890 = vmatpush1.msra.mxu0 0.0
      %891 = vmatprep.subr.mxu0 0.0
      %892 = vmatpush1.msra.mxu0 0.0
      %893 = vmatprep.subr.mxu0 0.0
      %894 = vmatpush1.msra.mxu0 0.0
      %895 = vmatprep.subr.mxu0 0.0
      %896 = vmatpush1.msra.mxu0 0.0
      %897 = vmatprep.subr.mxu0 0.0
      %898 = vmatpush1.msra.mxu0 0.0
      %899 = vmatprep.subr.mxu0 0.0
      %900 = vmatpush1.msra.mxu0 0.0
      %901 = vmatprep.subr.mxu0 0.0
      %902 = vmatpush1.msra.mxu0 0.0
      %903 = vmatprep.subr.mxu0 0.0
      %904 = vmatpush1.msra.mxu0 0.0
      %905 = vmatprep.subr.mxu0 0.0
      %906 = vmatpush1.msra.mxu0 0.0
      %907 = vmatprep.subr.mxu0 0.0
      %908 = vmatpush1.msra.mxu0 0.0
      %909 = vmatprep.subr.mxu0 0.0
      %910 = vmatpush1.msra.mxu0 0.0
      %911 = vmatprep.subr.mxu0 0.0
      %912 = vmatpush1.msra.mxu0 0.0
      %913 = vmatprep.mubr.f32.mxu0 0.0
      %914 = vmatmul.mubr.f32.gmra.mrb[0].mxu0 %v830
      %v915 = vpop.f32.mrb[0].mxu0
      %v916 = vadd.f32 0.0, %v915
      %v917 = vpop.f32.mrb[0].mxu0
      %918 = vdwg.mxu0
      %v919 = vadd.f32 %v827, %v916
    $region53: #{tpu_custom_call.1} parent=1 // loop_footer
      %s826 = sadd.s32 1, %s822
    $region54: #{tpu_custom_call.1} parent=1 // loop_footer_branch
      %821 = sbr.rel target = $region50
    $region55: #{tpu_custom_call.1} parent=1 // loop_exit
      _
    %v920 = vld [vmem:[%s5] sm:$0x1]
    %v922 = vlaneseq
    %v923 = vshrl.u32 %v922, 7
    %v924 = vsub.s32 0, %v923
    %v925 = vrot.slane %v920, %v924
    %v927 = vadd.f32 %v827, %v925
    %928 = vst [vmem:[#allocation12] sm:$0xff] %v927
    // Predicated region
    $region56: #{tpu_custom_call.1} parent=1 // pred_check
      _
    $region57: #{tpu_custom_call.1} parent=1 // pred_check_branch
      %930 = sbr.rel (0) target = $region59
    $region58: #{tpu_custom_call.1} parent=1 // pred_region
      %s932 = ssub.s32 128, 128
      %933 = vsyncadd [#allocation6], %s932
      %s935 = sshll.u32 [#allocation12], 4
      %s936 = int_to_ptr.vmem [resolvable:$true] %s935
      %938 = dma.vmem_to_hbm [thread:$0]  %s936, 128, %s6, [#allocation6]
    $region59: #{tpu_custom_call.1} parent=1 // pred_fallthru
      _
    // Predicated region
    $region60: #{tpu_custom_call.1} parent=1 // pred_check
      _
    $region61: #{tpu_custom_call.1} parent=1 // pred_check_branch
      %940 = sbr.rel (0) target = $region63
    $region62: #{tpu_custom_call.1} parent=1 // pred_region
      %941 = dma.done [#allocation6], 128
    $region63: #{tpu_custom_call.1} parent=1 // pred_fallthru
      _
    %942 = vsyncpa [#allocation5], 1
    %943 = vsyncpa [#allocation8], 1
    %944 = vsyncpa [#allocation11], 1
    %945 = vsyncpa [#allocation6], 1

</llo_original>
